<compile_context>
chip_gen: v7x
topology: tpu7x:2x2x1
jax: 0.10.0
libtpu: 0.0.40
codegen_flags: <defaults>
</compile_context>

<pallas_src>
import functools
import re

import jax
import jax.numpy as jnp
from jax.experimental import pallas as pl
from jax.experimental.pallas import tpu as pltpu


def _tpu_generation():
    """Best-effort TPU generation from device_kind ('TPU v6 lite' -> 6)."""
    try:
        kind = jax.devices()[0].device_kind.lower()
    except Exception:
        return None
    m = re.search(r"(?:tpu[\s_-]*v?|v)(\d+)", kind)
    return int(m.group(1)) if m else None


def _chip_config():
    """Per-generation TensorCore count / VMEM budgets (perf review)."""
    gen = _tpu_generation()
    if gen is None or gen <= 3:
        return dict(tc_count=1, vmem_limit=None, vmem_usable=10 * 2**20)
    if gen >= 7:        # v7x: 2 TCs, 64 MiB physical VMEM -> keep 32 MiB scoped
        return dict(tc_count=2, vmem_limit=32 * 2**20, vmem_usable=24 * 2**20)
    if gen >= 5:        # v5e / v6e: 1 TC, 128 MiB physical VMEM
        return dict(tc_count=1, vmem_limit=64 * 2**20, vmem_usable=52 * 2**20)
    # v4 megacore
    return dict(tc_count=2, vmem_limit=32 * 2**20, vmem_usable=24 * 2**20)


def _focal_loss_kernel(p_ref, tgt_ref, out_ref, acc_ref, *, gamma,
                       apply_softmax, n_total):
    pidx = pl.program_id(0)          # partial-sum index (megacore parallel axis)
    i = pl.program_id(1)             # batch-tile index within this partial

    @pl.when(i == 0)
    def _():
        acc_ref[...] = jnp.zeros((1, 1), jnp.float32)

    p = p_ref[...].astype(jnp.float32)           # (tile_n, C)
    tgt = tgt_ref[...]                           # (tile_n, 1) int32
    tile_n, c = p.shape

    # one-hot selection mask along the class (lane) axis
    classes = jax.lax.broadcasted_iota(jnp.int32, (tile_n, c), 1)
    cls_mask = classes == tgt                    # (tile_n, C)

    # global row validity (handles the last ragged tile and clamped blocks)
    j = pidx * pl.num_programs(1) + i            # unclamped global tile index
    rows = jax.lax.broadcasted_iota(jnp.int32, (tile_n, 1), 0)
    valid = (j * tile_n + rows) < n_total        # (tile_n, 1) bool

    # target-class value per row (logit in softmax branch, prob otherwise)
    x_t = jnp.sum(jnp.where(cls_mask, p, 0.0), axis=1, keepdims=True)

    if apply_softmax:
        # Exact per-row log-softmax; full-tile exp only for the row sum.
        m = jnp.max(p, axis=1, keepdims=True)
        z = jnp.sum(jnp.exp(p - m), axis=1, keepdims=True)
        log_sm = (x_t - m) - jnp.log(z)          # log softmax of target class
        log_sm = jnp.where(valid, log_sm, 0.0)   # sanitize garbage rows first
        p_t = jnp.exp(log_sm)                    # invalid rows -> exactly 1.0
    else:
        # p already holds probabilities; invalid rows -> 1.0 (zero loss).
        p_t = jnp.where(valid, x_t, 1.0)

    # gamma is a Python int -> integer_pow (VPU), not exp/log (EUP).
    loss_row = -1.0 * (1.0 - p_t) ** gamma * jnp.log(p_t + 1e-09)
    loss_row = jnp.where(valid, loss_row, 0.0)
    acc_ref[...] += jnp.sum(loss_row, keepdims=True)

    @pl.when(i == pl.num_programs(1) - 1)
    def _():
        out_ref[...] = acc_ref[...]


def focal_loss(input_d, target_d, *, gamma=2, model_name=None,
               label_distri=None, size_average=True,
               tile_n=None, num_partials=None):
    """Pallas TPU FocalLoss forward. input_d: (N, C), target_d: (N,) int."""
    if label_distri is not None:
        # TODO(synk): label_distri weighting not implemented (default is None).
        raise NotImplementedError("label_distri weighting not implemented")
    del size_average  # both branches of the reference return loss.sum()

    n, c = input_d.shape
    apply_softmax = not (model_name is None or "foda" in model_name)
    itemsize = jnp.dtype(input_d.dtype).itemsize
    align = max(8, 32 // itemsize)               # sublane packing (f32:8, bf16:16)

    cfg = _chip_config()
    if num_partials is None:
        num_partials = cfg["tc_count"]

    auto_tile = tile_n is None
    if auto_tile:
        # Per-row VMEM estimate: 2 double-buffered input rows (native dtype)
        # + K live f32 intermediate tiles (iota / mask / select, softmax exp)
        # + 2 double-buffered (row, 1) int32 target rows padded to 128 lanes.
        k_live = 4 if apply_softmax else 3
        per_row = 2 * c * itemsize + k_live * c * 4 + 2 * 128 * 4
        tile_n = max(align, (cfg["vmem_usable"] // per_row) // align * align)
    tile_n = int(min(tile_n, n))
    if tile_n < n:
        tile_n = max(align, (tile_n // align) * align)

    num_tiles = pl.cdiv(n, tile_n)
    p_count = max(1, min(num_partials, num_tiles))

    # Even split across TensorCores: every clamped overhang step is a redundant
    # full-tile HBM read, so rebalance tile_n when the auto-tiler is in charge.
    if auto_tile and p_count > 1 and num_tiles % p_count:
        desired = pl.cdiv(num_tiles, p_count) * p_count
        alt = pl.cdiv(pl.cdiv(n, desired), align) * align
        if alt >= align and pl.cdiv(n, alt) % p_count == 0:
            tile_n = alt
            num_tiles = pl.cdiv(n, alt)
    tiles_per_partial = pl.cdiv(num_tiles, p_count)

    tgt2d = target_d.astype(jnp.int32).reshape(n, 1)

    def data_map(pidx, i):
        # Clamp so overhanging grid steps re-read a valid block; the in-kernel
        # row-validity mask zeroes their contribution.
        j = jnp.minimum(pidx * tiles_per_partial + i, num_tiles - 1)
        return (j, 0)

    kernel = functools.partial(
        _focal_loss_kernel,
        gamma=gamma,
        apply_softmax=apply_softmax,
        n_total=n,
    )

    cost = pl.CostEstimate(
        flops=int(5 * n * c),
        transcendentals=int(n * (c + 4) if apply_softmax else 2 * n),
        bytes_accessed=int(n * c * itemsize + n * 4 + p_count * 4),
    )

    partials = pl.pallas_call(
        kernel,
        out_shape=jax.ShapeDtypeStruct((p_count, 1), jnp.float32),
        grid_spec=pltpu.PrefetchScalarGridSpec(
            num_scalar_prefetch=0,
            grid=(p_count, tiles_per_partial),
            in_specs=[
                pl.BlockSpec((tile_n, c), data_map),
                pl.BlockSpec((tile_n, 1), data_map),
            ],
            out_specs=pl.BlockSpec((1, 1), lambda pidx, i: (pidx, 0)),
            scratch_shapes=[pltpu.VMEM((1, 1), jnp.float32)],
        ),
        compiler_params=pltpu.CompilerParams(
            dimension_semantics=("parallel", "arbitrary"),
            vmem_limit_bytes=cfg["vmem_limit"],
        ),
        cost_estimate=cost,
    )(input_d, tgt2d)

    return jnp.sum(partials)


def focal_loss_ref(input_d, target_d, *, gamma=2, model_name=None):
    """Pure-JAX reference mirroring the PyTorch forward."""
    if model_name is None or "foda" in model_name:
        p = input_d
    else:
        p = jax.nn.softmax(input_d, axis=1)
    log_p = jnp.log(p + 1e-09)
    target_v = jax.nn.one_hot(target_d, input_d.shape[1], dtype=p.dtype)
    loss = -1.0 * (1.0 - p) ** gamma * log_p * target_v
    return loss.sum()


if __name__ == "__main__":
    # Default config path: probabilities in, gamma=2, model_name=None.
    N, C = 16, 128
    key = jax.random.PRNGKey(0)
    k_logits, k_tgt = jax.random.split(key)

    logits = jax.random.normal(k_logits, (N, C), dtype=jnp.float32)
    p_in = jax.nn.softmax(logits, axis=1)
    target = jax.random.randint(k_tgt, (N,), 0, C, dtype=jnp.int32)

    out = jax.block_until_ready(focal_loss(p_in, target, gamma=2, model_name=None))
    ref = focal_loss_ref(p_in, target, gamma=2, model_name=None)
    assert jnp.allclose(out, ref, rtol=1e-5, atol=1e-5), (out, ref)

    # Multi-tile + ragged-N + 2-partial path (row masking, block clamping).
    N2, C2 = 100, 32
    k1, k2 = jax.random.split(jax.random.PRNGKey(1))
    logits2 = jax.random.normal(k1, (N2, C2), dtype=jnp.float32)
    p2 = jax.nn.softmax(logits2, axis=1)
    tgt2 = jax.random.randint(k2, (N2,), 0, C2, dtype=jnp.int32)
    out2 = jax.block_until_ready(
        focal_loss(p2, tgt2, gamma=2, model_name=None, tile_n=16, num_partials=2))
    ref2 = focal_loss_ref(p2, tgt2, gamma=2, model_name=None)
    assert jnp.allclose(out2, ref2, rtol=1e-4, atol=1e-3), (out2, ref2)

    # Softmax branch (model_name set and without 'foda') — exact log-softmax.
    out3 = jax.block_until_ready(
        focal_loss(logits2, tgt2, gamma=2, model_name="resnet",
                   tile_n=16, num_partials=2))
    ref3 = focal_loss_ref(logits2, tgt2, gamma=2, model_name="resnet")
    assert jnp.allclose(out3, ref3, rtol=1e-4, atol=1e-3), (out3, ref3)

    # bf16 inputs streamed natively (HBM-bound: half the bytes).
    N4, C4 = 64, 128
    k3, k4 = jax.random.split(jax.random.PRNGKey(2))
    p4 = jax.nn.softmax(jax.random.normal(k3, (N4, C4), jnp.float32),
                        axis=1).astype(jnp.bfloat16)
    tgt4 = jax.random.randint(k4, (N4,), 0, C4, dtype=jnp.int32)
    out4 = jax.block_until_ready(focal_loss(p4, tgt4, gamma=2, model_name=None))
    ref4 = focal_loss_ref(p4.astype(jnp.float32), tgt4, gamma=2, model_name=None)
    assert jnp.allclose(out4, ref4, rtol=1e-4, atol=1e-3), (out4, ref4)

    print("KERNEL_OK")
</pallas_src>

<mosaic_0001>
module attributes {stable_mosaic.version = 11 : i64} {
  func.func @_focal_loss_kernel(%arg0: i32, %arg1: i32, %arg2: memref<16x128xf32, #tpu.memory_space<vmem>>, %arg3: memref<16x1xi32, #tpu.memory_space<vmem>>, %arg4: memref<1x1xf32, #tpu.memory_space<vmem>>, %arg5: memref<1x1xf32, #tpu.memory_space<vmem>>) attributes {dimension_semantics = [#tpu.dimension_semantics<parallel>, #tpu.dimension_semantics<arbitrary>], iteration_bounds = array<i64: 1, 1>, scalar_prefetch = 0 : i64, scratch_operands = 1 : i64, tpu.core_type = #tpu.core_type<tc>, window_params = [{transform_indices = @transform_0, window_bounds = array<i64: 16, 128>}, {transform_indices = @transform_1, window_bounds = array<i64: 16, 1>}, {transform_indices = @transform_2, window_bounds = array<i64: 1, 1>}]} {
    %c0_i32 = arith.constant 0 : i32
    %0 = arith.cmpi eq, %arg1, %c0_i32 : i32
    %1 = arith.extui %0 : i1 to i32
    %c0_i32_0 = arith.constant 0 : i32
    %2 = arith.cmpi ne, %1, %c0_i32_0 : i32
    scf.if %2 {
      %cst_18 = arith.constant 0.000000e+00 : f32
      %44 = vector.broadcast %cst_18 : f32 to vector<1x1xf32>
      %c0_19 = arith.constant 0 : index
      %c0_20 = arith.constant 0 : index
      %45 = vector.load %arg5[%c0_19, %c0_20] : memref<1x1xf32, #tpu.memory_space<vmem>>, vector<1x1xf32>
      tpu.vector_store %arg5[%c0_19, %c0_20], %44 {strides = array<i32>} : memref<1x1xf32, #tpu.memory_space<vmem>>, vector<1x1xf32>,
    } else {
    }
    %c0 = arith.constant 0 : index
    %c0_1 = arith.constant 0 : index
    %3 = vector.load %arg2[%c0, %c0_1] : memref<16x128xf32, #tpu.memory_space<vmem>>, vector<16x128xf32>
    %c0_2 = arith.constant 0 : index
    %c0_3 = arith.constant 0 : index
    %4 = vector.load %arg3[%c0_2, %c0_3] : memref<16x1xi32, #tpu.memory_space<vmem>>, vector<16x1xi32>
    %5 = tpu.iota {dimensions = array<i32: 1>} : vector<16x128xi32>
    %6 = vector.broadcast %4 : vector<16x1xi32> to vector<16x128xi32>
    %7 = arith.cmpi eq, %5, %6 : vector<16x128xi32>
    %c1_i32 = arith.constant 1 : i32
    %8 = arith.muli %arg0, %c1_i32 : i32
    %9 = arith.addi %8, %arg1 : i32
    %10 = tpu.iota {dimensions = array<i32: 0>} : vector<16x1xi32>
    %c16_i32 = arith.constant 16 : i32
    %11 = arith.muli %9, %c16_i32 : i32
    %12 = vector.broadcast %11 : i32 to vector<16x1xi32>
    %13 = arith.addi %12, %10 : vector<16x1xi32>
    %c16_i32_4 = arith.constant 16 : i32
    %14 = vector.broadcast %c16_i32_4 : i32 to vector<16x1xi32>
    %15 = arith.cmpi slt, %13, %14 : vector<16x1xi32>
    %cst = arith.constant 0.000000e+00 : f32
    %16 = vector.broadcast %cst : f32 to vector<16x128xf32>
    %17 = arith.select %7, %3, %16 : vector<16x128xi1>, vector<16x128xf32>
    %cst_5 = arith.constant dense<0.000000e+00> : vector<16xf32>
    %18 = vector.multi_reduction <add>, %17, %cst_5 [1] : vector<16x128xf32> to vector<16xf32>
    %19 = vector.shape_cast %18 : vector<16xf32> to vector<16x1xf32>
    %cst_6 = arith.constant 1.000000e+00 : f32
    %20 = vector.broadcast %cst_6 : f32 to vector<16x1xf32>
    %21 = arith.select %15, %19, %20 : vector<16x1xi1>, vector<16x1xf32>
    %cst_7 = arith.constant 1.000000e+00 : f32
    %22 = vector.broadcast %cst_7 : f32 to vector<16x1xf32>
    %23 = arith.subf %22, %21 : vector<16x1xf32>
    %24 = arith.mulf %23, %23 : vector<16x1xf32>
    %cst_8 = arith.constant -1.000000e+00 : f32
    %25 = vector.broadcast %cst_8 : f32 to vector<16x1xf32>
    %26 = arith.mulf %25, %24 : vector<16x1xf32>
    %cst_9 = arith.constant 9.99999971E-10 : f32
    %27 = vector.broadcast %cst_9 : f32 to vector<16x1xf32>
    %28 = arith.addf %21, %27 : vector<16x1xf32>
    %29 = math.log %28 : vector<16x1xf32>
    %30 = arith.mulf %26, %29 : vector<16x1xf32>
    %cst_10 = arith.constant 0.000000e+00 : f32
    %31 = vector.broadcast %cst_10 : f32 to vector<16x1xf32>
    %32 = arith.select %15, %30, %31 : vector<16x1xi1>, vector<16x1xf32>
    %c0_11 = arith.constant 0 : index
    %c0_12 = arith.constant 0 : index
    %33 = vector.load %arg5[%c0_11, %c0_12] : memref<1x1xf32, #tpu.memory_space<vmem>>, vector<1x1xf32>
    %34 = vector.shape_cast %32 : vector<16x1xf32> to vector<1x16x1xf32>
    %cst_13 = arith.constant dense<0.000000e+00> : vector<1xf32>
    %35 = vector.multi_reduction <add>, %34, %cst_13 [1, 2] : vector<1x16x1xf32> to vector<1xf32>
    %36 = vector.shape_cast %35 : vector<1xf32> to vector<1x1x1xf32>
    %37 = vector.extract %36[0, 0, 0] : f32 from vector<1x1x1xf32>
    %38 = vector.broadcast %37 : f32 to vector<1x1xf32>
    %39 = arith.addf %33, %38 : vector<1x1xf32>
    %c0_14 = arith.constant 0 : index
    %c0_15 = arith.constant 0 : index
    %40 = vector.load %arg5[%c0_14, %c0_15] : memref<1x1xf32, #tpu.memory_space<vmem>>, vector<1x1xf32>
    tpu.vector_store %arg5[%c0_14, %c0_15], %39 {strides = array<i32>} : memref<1x1xf32, #tpu.memory_space<vmem>>, vector<1x1xf32>,
    %c0_i32_16 = arith.constant 0 : i32
    %41 = arith.cmpi eq, %arg1, %c0_i32_16 : i32
    %42 = arith.extui %41 : i1 to i32
    %c0_i32_17 = arith.constant 0 : i32
    %43 = arith.cmpi ne, %42, %c0_i32_17 : i32
    scf.if %43 {
      %c0_18 = arith.constant 0 : index
      %c0_19 = arith.constant 0 : index
      %44 = vector.load %arg5[%c0_18, %c0_19] : memref<1x1xf32, #tpu.memory_space<vmem>>, vector<1x1xf32>
      %c0_20 = arith.constant 0 : index
      %c0_21 = arith.constant 0 : index
      %45 = vector.load %arg4[%c0_20, %c0_21] : memref<1x1xf32, #tpu.memory_space<vmem>>, vector<1x1xf32>
      tpu.vector_store %arg4[%c0_20, %c0_21], %44 {strides = array<i32>} : memref<1x1xf32, #tpu.memory_space<vmem>>, vector<1x1xf32>,
    } else {
    }
    return
  }
  func.func @transform_0(%arg0: i32, %arg1: i32) -> (i32, i32) {
    %c1_i32 = arith.constant 1 : i32
    %0 = arith.muli %arg0, %c1_i32 : i32
    %1 = arith.addi %0, %arg1 : i32
    %c0_i32 = arith.constant 0 : i32
    %2 = arith.minsi %1, %c0_i32 : i32
    %c0_i32_0 = arith.constant 0 : i32
    %c0_i32_1 = arith.constant 0 : i32
    return %2, %c0_i32_0 : i32, i32
  }
  func.func @transform_1(%arg0: i32, %arg1: i32) -> (i32, i32) {
    %c1_i32 = arith.constant 1 : i32
    %0 = arith.muli %arg0, %c1_i32 : i32
    %1 = arith.addi %0, %arg1 : i32
    %c0_i32 = arith.constant 0 : i32
    %2 = arith.minsi %1, %c0_i32 : i32
    %c0_i32_0 = arith.constant 0 : i32
    %c0_i32_1 = arith.constant 0 : i32
    return %2, %c0_i32_0 : i32, i32
  }
  func.func @transform_2(%arg0: i32, %arg1: i32) -> (i32, i32) {
    %c0_i32 = arith.constant 0 : i32
    %c0_i32_0 = arith.constant 0 : i32
    return %arg0, %c0_i32 : i32, i32
  }
}

</mosaic_0001>

<llo_original>
// kernel: tpu_custom_call.1
$region0: #{tpu_custom_call.1}
  #allocation0 [shape = 'u32[]', space=smem, size = 0x4, offset = 0x4, fixed_abs, tag = 'smem constant byte address 0x4 - core index']
  #allocation1 [shape = 'u32[144,128]{1,0:T(1,128)}', space=vmem, size = 0x12000, scoped, tag = 'internal scratch']
  #allocation2 [shape = 'f32[1,1]{1,0:T(1,128)}', space=vmem, size = 0x200, scoped, tag = 'scratch operand']
  %s0 = inlined_call_operand.vmem [shape: f32[16,128], index: 0, kind: input, shape index: {}]
  %s1 = inlined_call_operand.vmem [shape: s32[16,1], index: 1, kind: input, shape index: {}]
  %s2 = inlined_call_operand.hbm [shape: f32[1,1], index: 2, kind: output, shape index: {}]
  %s3 = sld [smem:[#allocation0]]
  $region26: #{tpu_custom_call.1} parent=0
    _
  %s5 = ssub.s32 1, %s3
  %s6 = scalar_select 0, %s5, %s3
  $region1: #{tpu_custom_call.1} parent=0
    #allocation3 [shape = 'u8[512]{0}', space=vmem, size = 0x400, scoped, tag = 'output window, operand 0, single buffered']
    #allocation4 [shape = 's32[1]{0}', space=sflag, size = 0x4, scoped, tag = 'scoped memory for tpu_custom_call.1']
    %7 = vsyncpa [#allocation4], 0
    // Predicated region
    $region2: #{tpu_custom_call.1} parent=1 // pred_check
      _
    $region3: #{tpu_custom_call.1} parent=1 // pred_check_branch
      %9 = sbr.rel (0) target = $region5
    $region4: #{tpu_custom_call.1} parent=1 // pred_region
      %s10 = sadd.s32 0, 0
      %p11 = scmp.lt.s32.totalorder %s10, 0
      %s12 = scalar_select %p11, %s10, 0
      %s13 = smul.u32 2, %s12
      %p14 = scmp.lt.s32.totalorder %s13, 1
      %s15 = scalar_select %p14, %s13, 1
      %s16 = smul.addr %s15, 8
      %s17 = scalar_lea.vmem %s0, %s16
      %s18 = sadd.s32 0, 0
      %p19 = scmp.lt.s32.totalorder %s18, 0
      %s20 = scalar_select %p19, %s18, 0
      %s21 = smul.u32 2, %s20
    $region5: #{tpu_custom_call.1} parent=1 // pred_fallthru
      _
    // Predicated region
    $region6: #{tpu_custom_call.1} parent=1 // pred_check
      _
    $region7: #{tpu_custom_call.1} parent=1 // pred_check_branch
      %23 = sbr.rel (0) target = $region9
    $region8: #{tpu_custom_call.1} parent=1 // pred_region
      %s24 = sadd.s32 0, 0
      %p25 = scmp.lt.s32.totalorder %s24, 0
      %s26 = scalar_select %p25, %s24, 0
      %s27 = smul.u32 2, %s26
      %p28 = scmp.lt.s32.totalorder %s27, 1
      %s29 = scalar_select %p28, %s27, 1
      %s30 = smul.addr %s29, 8
      %s31 = scalar_lea.vmem %s1, %s30
      %s32 = sadd.s32 0, 0
      %p33 = scmp.lt.s32.totalorder %s32, 0
      %s34 = scalar_select %p33, %s32, 0
      %s35 = smul.u32 2, %s34
    $region9: #{tpu_custom_call.1} parent=1 // pred_fallthru
      _
    %s36 = sadd.s32 0, 0
    %p37 = scmp.lt.s32.totalorder %s36, 0
    %s38 = scalar_select %p37, %s36, 0
    %s39 = smul.u32 2, %s38
    %p40 = scmp.lt.s32.totalorder %s39, 1
    %s41 = scalar_select %p40, %s39, 1
    %s42 = smul.addr %s41, 8
    %s43 = scalar_lea.vmem %s0, %s42
    %s44 = sadd.s32 0, 0
    %p45 = scmp.lt.s32.totalorder %s44, 0
    %s46 = scalar_select %p45, %s44, 0
    %s47 = smul.u32 2, %s46
    %p48 = scmp.lt.s32.totalorder %s47, 1
    %s49 = scalar_select %p48, %s47, 1
    %s50 = smul.addr %s49, 8
    %s51 = scalar_lea.vmem %s1, %s50
    %s52 = sadd.s32 0, 0
    %p53 = scmp.lt.s32.totalorder %s52, 0
    %s54 = scalar_select %p53, %s52, 0
    %s55 = smul.u32 2, %s54
    %p56 = scmp.lt.s32.totalorder %s55, 1
    %s57 = scalar_select %p56, %s55, 1
    %s58 = smul.addr %s57, 8
    %s59 = scalar_lea.vmem %s0, %s58
    %s60 = sadd.s32 0, 0
    %p61 = scmp.lt.s32.totalorder %s60, 0
    %s62 = scalar_select %p61, %s60, 0
    %s63 = smul.u32 2, %s62
    %s64 = sadd.s32 0, 0
    %p65 = scmp.lt.s32.totalorder %s64, 0
    %s66 = scalar_select %p65, %s64, 0
    %s67 = smul.u32 2, %s66
    %p68 = scmp.lt.s32.totalorder %s67, 1
    %s69 = scalar_select %p68, %s67, 1
    %s70 = smul.addr %s69, 8
    %s71 = scalar_lea.vmem %s1, %s70
    %s72 = sadd.s32 0, 0
    %p73 = scmp.lt.s32.totalorder %s72, 0
    %s74 = scalar_select %p73, %s72, 0
    %s75 = smul.u32 2, %s74
    %p76 = scmp.eq.s32.totalorder 0, 0
    // Predicated region
    $region10: #{tpu_custom_call.1} parent=1 // pred_check
      %p77 = pneg %p76
    $region11: #{tpu_custom_call.1} parent=1 // pred_check_branch
      %79 = sbr.rel (%p77) target = $region13
    $region12: #{tpu_custom_call.1} parent=1 // pred_region
      %vm80 = vcmask 0
      %81 = vst.msk [vmem:[#allocation2] sm:$0x1] %vm80, 0.0
    $region13: #{tpu_custom_call.1} parent=1 // pred_fallthru
      _
    %v82 = vld [vmem:[%s59] sm:$0xff]
    %v83 = vld [vmem:[%s59 + $0x8] sm:$0xff]
    %v84 = vld [vmem:[%s71] sm:$0xff]
    %v85 = vld [vmem:[%s71 + $0x8] sm:$0xff]
    %v86 = vlaneseq
    %v87 = vand.u32 %v86, 127
    %88 = vset.pattern.permute.xlu0 0
    %89 = vperm.xlu0 %88, %v84
    %v90 = vpop.permute.xlu0 %89
    %91 = vset.pattern.permute.xlu0 0
    %92 = vperm.xlu0 %91, %v85
    %v93 = vpop.permute.xlu0 %92
    %vm94 = vcmp.eq.s32.totalorder %v87, %v90
    %vm95 = vcmp.eq.s32.totalorder %v87, %v93
    %s96 = sadd.s32 0, 0
    %v97 = vlaneseq
    %v98 = vshrl.u32 %v97, 7
    %v99 = vadd.s32 %v98, 8
    %s100 = smul.u32 %s96, 16
    %v101 = vstv %s100
    %v102 = vadd.s32 %v101, %v98
    %v103 = vadd.s32 %v101, %v99
    %vm104 = vcmp.lt.s32.totalorder %v102, 16
    %vm105 = vcmp.lt.s32.totalorder %v103, 16
    %v106 = vsel %vm94, %v82, 0.0
    %v107 = vsel %vm95, %v83, 0.0
    %108 = vadd.xlane.f32.xlu0 %v106
    %v109 = vpop.xlane.xlu0 %108
    %110 = vadd.xlane.f32.xlu0 %v107
    %v111 = vpop.xlane.xlu0 %110
    %v112 = vsel %vm104, %v109, 1.0
    %v113 = vsel %vm105, %v111, 1.0
    %v114 = vsub.f32 1.0, %v112
    %v115 = vsub.f32 1.0, %v113
    %v116 = vmul.f32 %v114, %v114
    %v117 = vmul.f32 %v115, %v115
    %v118 = vmul.f32 %v116, -1.0
    %v119 = vmul.f32 %v117, -1.0
    %v120 = vadd.f32 %v112, 1e-09
    %v121 = vadd.f32 %v113, 1e-09
    %v122 = vlog2.pop %v120
    %v123 = vmul.f32 %v122, 0.6931472
    %v124 = vlog2.pop %v121
    %v125 = vmul.f32 %v124, 0.6931472
    %v126 = vmul.f32 %v118, %v123
    %v127 = vmul.f32 %v119, %v125
    %v128 = vsel %vm104, %v126, 0.0
    %v129 = vsel %vm105, %v127, 0.0
    %v130 = vld [vmem:[#allocation2] sm:$0x1]
    %vm131 = vcmask 7168
    %v132 = vsel %vm131, %v128, 0.0
    %v133 = vsel %vm131, %v129, 0.0
    %v134 = vadd.f32 %v132, %v133
    %135 = vadd.xlane.f32.xlu0 %v134
    %v136 = vpop.xlane.xlu0 %135
    %v137 = vrot.slane %v136, 4
    %v138 = vadd.f32 %v136, %v137
    %v139 = vrot.slane %v138, 2
    %v140 = vadd.f32 %v138, %v139
    %v141 = vrot.slane %v140, 1
    %v142 = vadd.f32 %v140, %v141
    %s143 = vtos %v142
    %v144 = vstv %s143
    %v145 = vadd.f32 %v130, %v144
    %vm146 = vcmask 0
    %147 = vst.msk [vmem:[#allocation2] sm:$0x1] %vm146, %v145
    // Predicated region
    $region14: #{tpu_custom_call.1} parent=1 // pred_check
      %p148 = pneg %p76
    $region15: #{tpu_custom_call.1} parent=1 // pred_check_branch
      %150 = sbr.rel (%p148) target = $region17
    $region16: #{tpu_custom_call.1} parent=1 // pred_region
      %v151 = vld [vmem:[#allocation2] sm:$0x1]
      %152 = vst.msk [vmem:[#allocation3] sm:$0x1] %vm146, %v151
    $region17: #{tpu_custom_call.1} parent=1 // pred_fallthru
      _
    // Predicated region
    $region18: #{tpu_custom_call.1} parent=1 // pred_check
      _
    $region19: #{tpu_custom_call.1} parent=1 // pred_check_branch
      %154 = sbr.rel (0) target = $region21
    $region20: #{tpu_custom_call.1} parent=1 // pred_region
      %s156 = ssub.s32 16, 16
      %157 = vsyncadd [#allocation4], %s156
      %s159 = sshll.u32 [#allocation3], 4
      %s160 = int_to_ptr.vmem [resolvable:$true] %s159
      %162 = dma.vmem_to_hbm [thread:$0]  %s160, 16, %s2, [#allocation4]
    $region21: #{tpu_custom_call.1} parent=1 // pred_fallthru
      _
    // Predicated region
    $region22: #{tpu_custom_call.1} parent=1 // pred_check
      _
    $region23: #{tpu_custom_call.1} parent=1 // pred_check_branch
      %164 = sbr.rel (0) target = $region25
    $region24: #{tpu_custom_call.1} parent=1 // pred_region
      %165 = dma.done [#allocation4], 16
    $region25: #{tpu_custom_call.1} parent=1 // pred_fallthru
      _
    %166 = vsyncpa [#allocation4], 1

</llo_original>
